<compile_context>
chip_gen: v6e
topology: v6e:2x2x1
jax: 0.10.0
libtpu: 0.0.40
codegen_flags: <defaults>
</compile_context>

<pallas_src>
import jax
import jax.numpy as jnp
from jax.experimental import pallas as pl
from jax.experimental.pallas import tpu as pltpu

BN_EPS = 1e-5


# ----------------------------- Pallas kernels -----------------------------

def _squeeze_kernel(x_ref, wc_ref, b1_ref, kshift_ref, maps_ref, stats_ref):
    """Channel squeeze (avg / max / 1x1x1-conv over C) + shifted BN partials.

    x_ref:      (1, C, tS)   VMEM, input dtype
    wc_ref:     (2, C)       VMEM f32   rows: [1/C (avg), w1 (1x1x1 conv)]
    b1_ref:     (1,)         SMEM f32   1x1x1 conv bias
    kshift_ref: (C, 1)       VMEM f32   per-channel BN shift K
    maps_ref:   (1, 3, tS)   VMEM out, input dtype   rows: [avg, max, conv1x1]
    stats_ref:  (1, 1, C, 2) VMEM out f32   [sum(x-K), sum((x-K)^2)]
    """
    x = x_ref[0].astype(jnp.float32)                                  # (C, tS)

    # avg-over-C and the 1x1x1 conv as one tiny MXU matmul: the MXU is
    # otherwise idle here, and moving these off the VPU keeps the VALU slot
    # below saturation on v7x (where HBM is ~3.2 TB/s).
    mc = jnp.dot(wc_ref[...], x,
                 preferred_element_type=jnp.float32,
                 precision=jax.lax.Precision.HIGHEST)                 # (2, tS)
    maps_ref[0, 0:1, :] = mc[0:1, :].astype(maps_ref.dtype)
    maps_ref[0, 1:2, :] = jnp.max(x, axis=0, keepdims=True).astype(maps_ref.dtype)
    maps_ref[0, 2:3, :] = (mc[1:2, :] + b1_ref[0]).astype(maps_ref.dtype)

    # BatchNorm partial sums about a per-channel shift K (cancellation-safe
    # single pass); padded columns are corrected exactly in the XLA combine.
    d = x - kshift_ref[...]                                           # (C, tS)
    stats_ref[0, 0, :, 0:1] = jnp.sum(d, axis=1, keepdims=True)
    stats_ref[0, 0, :, 1:2] = jnp.sum(d * d, axis=1, keepdims=True)


def _excite_kernel(x_ref, logit_ref, scale_ref, shift_ref, out_ref):
    """sigmoid(gate logits) * train-mode-BatchNorm-affine(x).

    x_ref:     (1, C, tS)  VMEM, input dtype
    logit_ref: (1, 1, tS)  VMEM, input dtype   pre-sigmoid 7^3-conv output
    scale_ref: (C, 1)      VMEM f32   gamma / sqrt(var + eps)
    shift_ref: (C, 1)      VMEM f32   beta - mean * scale
    out_ref:   (1, C, tS)  VMEM out, input dtype
    """
    z = logit_ref[0].astype(jnp.float32)                              # (1, tS)
    # sigmoid(z) = 0.5*(tanh(z/2)+1): transcendental entirely on the EUP,
    # no VALU divide; logits are only 1/C of the streamed bytes.
    gate = 0.5 * (jnp.tanh(0.5 * z) + 1.0)
    xn = x_ref[0].astype(jnp.float32) * scale_ref[...] + shift_ref[...]
    out_ref[0] = (xn * gate).astype(out_ref.dtype)                    # (C, tS)


# --------------------------------- glue -----------------------------------

def _vmem_limit_bytes():
    """~75% of this generation's per-TensorCore VMEM (headroom for Pallas'
    own double buffers and compiler-internal scratch)."""
    cap = 64 * 1024 * 1024                    # conservative fallback (v7x size)
    try:
        info = pltpu.get_tpu_info()
        cap = int(getattr(info, "vmem_capacity_bytes", cap) or cap)
    except Exception:
        pass
    return (3 * cap) // 4


def _pick_spatial_tile(s_pad, c, b, itemsize, budget_bytes, min_steps=8):
    """Largest lane tile (multiple of 128, dividing s_pad) inside the VMEM
    budget, additionally capped so the grid keeps >= min_steps total steps."""
    # bytes per lane column live per grid step: double-buffered streamed tiles
    # (x / logits / out / maps) in the input dtype + in-kernel f32 temporaries.
    per_lane = 2 * (2 * c + 4) * itemsize + (2 * c + 6) * 4
    ts = (budget_bytes // per_lane) // 128 * 128
    ts = max(128, min(s_pad, ts))
    # keep the auto-pipeline busy: at least min_steps grid steps when S allows.
    want_ns = max(1, -(-min_steps // max(b, 1)))           # ceil(min_steps / b)
    ts = min(ts, max(128, (s_pad // want_ns) // 128 * 128))
    while s_pad % ts:
        ts -= 128
    return ts


def spatial_se_3d(x, params):
    B, C, D, H, W = x.shape
    S = D * H * W
    S_pad = ((S + 127) // 128) * 128
    itemsize = jnp.dtype(x.dtype).itemsize

    vmem_limit = _vmem_limit_bytes()
    tile_budget = min(16 * 1024 * 1024, vmem_limit // 3)
    tS = _pick_spatial_tile(S_pad, C, B, itemsize, tile_budget)
    nS = S_pad // tS

    x_flat = x.reshape(B, C, S)

    # ---- parameters -------------------------------------------------------
    w1 = params["conv_w"].reshape(C).astype(jnp.float32)
    wc = jnp.stack([jnp.full((C,), 1.0 / C, jnp.float32), w1])        # (2, C)
    b1 = params["conv_b"].reshape(1).astype(jnp.float32)
    w7 = params["conv1_w"].reshape(1, 3, 7, 7, 7)
    b7 = params["conv1_b"].reshape(()).astype(jnp.float32)
    gamma = params["bn_gamma"].astype(jnp.float32)
    beta = params["bn_beta"].astype(jnp.float32)

    # cheap per-channel shift for the cancellation-safe single-pass variance
    k_len = min(S, 128)
    kshift = jnp.mean(x_flat[:, :, :k_len].astype(jnp.float32),
                      axis=(0, 2)).reshape(C, 1)                      # (C, 1)

    if S_pad != S:
        x_flat = jnp.pad(x_flat, ((0, 0), (0, 0), (0, S_pad - S)))

    cparams = pltpu.CompilerParams(
        dimension_semantics=("parallel", "parallel"),
        vmem_limit_bytes=vmem_limit)

    # ---- kernel 1: channel squeeze + shifted BN partials (1 read of x) ----
    maps, stats = pl.pallas_call(
        _squeeze_kernel,
        out_shape=(jax.ShapeDtypeStruct((B, 3, S_pad), x.dtype),
                   jax.ShapeDtypeStruct((B, nS, C, 2), jnp.float32)),
        grid=(B, nS),
        in_specs=[pl.BlockSpec((1, C, tS), lambda b, s: (b, 0, s)),
                  pl.BlockSpec((2, C), lambda b, s: (0, 0)),
                  pl.BlockSpec(memory_space=pltpu.MemorySpace.SMEM),
                  pl.BlockSpec((C, 1), lambda b, s: (0, 0))],
        out_specs=(pl.BlockSpec((1, 3, tS), lambda b, s: (b, 0, s)),
                   pl.BlockSpec((1, 1, C, 2), lambda b, s: (b, s, 0, 0))),
        compiler_params=cparams,
        cost_estimate=pl.CostEstimate(
            flops=(4 * C + 4) * B * S_pad,
            transcendentals=0,
            bytes_accessed=(B * C * S_pad + B * 3 * S_pad) * itemsize
                           + B * nS * C * 2 * 4),
    )(x_flat, wc, b1, kshift)

    # ---- BatchNorm statistics combine (tiny, C elements; train mode) ----
    n = B * S
    pad_cols = B * (S_pad - S)
    sums = jnp.sum(stats, axis=(0, 1))                       # (C, 2)
    k = kshift[:, 0]                                         # (C,)
    s1 = sums[:, 0] + pad_cols * k                           # drop padded cols
    s2 = sums[:, 1] - pad_cols * k * k
    mean = k + s1 / n
    var = jnp.maximum(s2 / n - (s1 / n) ** 2, 0.0)           # biased variance
    scale_c = gamma * jax.lax.rsqrt(var + BN_EPS)
    shift_c = beta - mean * scale_c
    scale = scale_c.reshape(C, 1)
    shift = shift_c.reshape(C, 1)

    # ---- 7x7x7 conv over the 3 squeeze maps (3 -> 1 ch) ----
    # Layout-matched NCDHW conv over the (B,3,S) maps (free reshape, no HLO
    # transpose); runs in the streaming dtype, accumulates in f32.
    # TODO(synk): fold this conv into the excite kernel over halo'd map tiles
    # if it dominates wall time for large volumes (OC=1 -> poor MXU N-util).
    maps_s = maps[:, :, :S] if S_pad != S else maps
    logits = jax.lax.conv_general_dilated(
        maps_s.reshape(B, 3, D, H, W), w7.astype(maps.dtype),
        window_strides=(1, 1, 1), padding=((3, 3), (3, 3), (3, 3)),
        dimension_numbers=("NCDHW", "OIDHW", "NCDHW"),
        preferred_element_type=jnp.float32)                  # (B, 1, D, H, W)
    logits = (logits.reshape(B, 1, S) + b7).astype(x.dtype)
    if S_pad != S:
        logits = jnp.pad(logits, ((0, 0), (0, 0), (0, S_pad - S)))

    # ---- kernel 2: sigmoid gate + BN affine + gating multiply ----
    # TODO(synk): add input_output_aliases={0: 0} when the caller donates x
    # (reuses x's buffer for the output; with a non-donated input XLA would
    # insert a defensive copy, so it is left off by default).
    out_flat = pl.pallas_call(
        _excite_kernel,
        out_shape=jax.ShapeDtypeStruct((B, C, S_pad), x.dtype),
        grid=(B, nS),
        in_specs=[pl.BlockSpec((1, C, tS), lambda b, s: (b, 0, s)),
                  pl.BlockSpec((1, 1, tS), lambda b, s: (b, 0, s)),
                  pl.BlockSpec((C, 1), lambda b, s: (0, 0)),
                  pl.BlockSpec((C, 1), lambda b, s: (0, 0))],
        out_specs=pl.BlockSpec((1, C, tS), lambda b, s: (b, 0, s)),
        compiler_params=cparams,
        cost_estimate=pl.CostEstimate(
            flops=(3 * C + 3) * B * S_pad,
            transcendentals=B * S_pad,
            bytes_accessed=(2 * C + 2) * B * S_pad * itemsize),
    )(x_flat, logits, scale, shift)

    out_flat = out_flat[:, :, :S] if S_pad != S else out_flat
    return out_flat.reshape(B, C, D, H, W)


# ----------------------------- pure-JAX reference -----------------------------

def _reference(x, w1, b1, w7, b7, gamma, beta):
    B, C, D, H, W = x.shape
    xconv1 = jnp.einsum('bcdhw,c->bdhw', x, w1) + b1               # Conv3d(C,1,1)
    xavg = jnp.mean(x, axis=1)
    xmax = jnp.max(x, axis=1)
    m = jnp.stack([xavg, xmax, xconv1], axis=1)                    # (B,3,D,H,W)
    conv = jax.lax.conv_general_dilated(
        m, w7[None], window_strides=(1, 1, 1),
        padding=((3, 3), (3, 3), (3, 3)),
        dimension_numbers=('NCDHW', 'OIDHW', 'NCDHW'))[:, 0] + b7
    gate = jax.nn.sigmoid(conv)                                    # (B,D,H,W)
    mean = jnp.mean(x, axis=(0, 2, 3, 4), keepdims=True)
    var = jnp.mean((x - mean) ** 2, axis=(0, 2, 3, 4), keepdims=True)
    xn = (x - mean) / jnp.sqrt(var + BN_EPS)
    xn = xn * gamma[None, :, None, None, None] + beta[None, :, None, None, None]
    return xn * gate[:, None]


if __name__ == "__main__":
    key = jax.random.PRNGKey(0)
    B, C, D, H, W = 2, 4, 8, 8, 8
    k_x, k_w1, k_b1, k_w7, k_b7, k_g, k_be = jax.random.split(key, 7)
    x = jax.random.normal(k_x, (B, C, D, H, W), jnp.float32)
    params = {
        "conv_w": 0.5 * jax.random.normal(k_w1, (1, C, 1, 1, 1), jnp.float32),
        "conv_b": 0.1 * jax.random.normal(k_b1, (1,), jnp.float32),
        "conv1_w": 0.05 * jax.random.normal(k_w7, (1, 3, 7, 7, 7), jnp.float32),
        "conv1_b": 0.1 * jax.random.normal(k_b7, (1,), jnp.float32),
        "bn_gamma": 1.0 + 0.1 * jax.random.normal(k_g, (C,), jnp.float32),
        "bn_beta": 0.1 * jax.random.normal(k_be, (C,), jnp.float32),
    }

    out = jax.jit(spatial_se_3d)(x, params)
    out = jax.block_until_ready(out)

    ref = _reference(x, params["conv_w"].reshape(C), params["conv_b"],
                     params["conv1_w"].reshape(3, 7, 7, 7), params["conv1_b"],
                     params["bn_gamma"], params["bn_beta"])
    err = float(jnp.max(jnp.abs(out - ref)))
    if not err < 1e-3:
        raise AssertionError(f"mismatch vs reference: max abs err {err}")
    print("KERNEL_OK")
</pallas_src>

<mosaic_0001>
module attributes {stable_mosaic.version = 11 : i64} {
  func.func @_squeeze_kernel(%arg0: i32, %arg1: i32, %arg2: memref<1x4x128xf32, #tpu.memory_space<vmem>>, %arg3: memref<2x4xf32, #tpu.memory_space<vmem>>, %arg4: memref<1xf32, #tpu.memory_space<smem>>, %arg5: memref<4x1xf32, #tpu.memory_space<vmem>>, %arg6: memref<1x3x128xf32, #tpu.memory_space<vmem>>, %arg7: memref<1x1x4x2xf32, #tpu.memory_space<vmem>>) attributes {dimension_semantics = [#tpu.dimension_semantics<parallel>, #tpu.dimension_semantics<parallel>], iteration_bounds = array<i64: 2, 4>, scalar_prefetch = 0 : i64, scratch_operands = 0 : i64, tpu.core_type = #tpu.core_type<tc>, window_params = [{transform_indices = @transform_0, window_bounds = array<i64: 1, 4, 128>}, {pipeline_mode = #tpu.pipeline_mode<synchronous>, transform_indices = @transform_1, window_bounds = array<i64: 2, 4>}, {transform_indices = @transform_2, window_bounds = array<i64: 1>}, {pipeline_mode = #tpu.pipeline_mode<synchronous>, transform_indices = @transform_3, window_bounds = array<i64: 4, 1>}, {transform_indices = @transform_4, window_bounds = array<i64: 1, 3, 128>}, {transform_indices = @transform_5, window_bounds = array<i64: 1, 1, 4, 2>}]} {
    %c0 = arith.constant 0 : index
    %c0_0 = arith.constant 0 : index
    %c0_1 = arith.constant 0 : index
    %0 = vector.load %arg2[%c0, %c0_0, %c0_1] : memref<1x4x128xf32, #tpu.memory_space<vmem>>, vector<1x4x128xf32>
    %1 = vector.shape_cast %0 : vector<1x4x128xf32> to vector<4x128xf32>
    %c0_2 = arith.constant 0 : index
    %c0_3 = arith.constant 0 : index
    %2 = vector.load %arg3[%c0_2, %c0_3] : memref<2x4xf32, #tpu.memory_space<vmem>>, vector<2x4xf32>
    %cst = arith.constant dense<0.000000e+00> : vector<2x128xf32>
    %3 = tpu.matmul %2, %1, %cst {dimension_numbers = #tpu.dot_dimension_numbers<[1], [0], [0], [1], [0, 0, 1, 1], [], []>, precision = #tpu.contract_precision<fp32>} : vector<2x4xf32>, vector<4x128xf32>, vector<2x128xf32> -> vector<2x128xf32>
    %4 = vector.extract_strided_slice %3 {offsets = [0, 0], sizes = [1, 128], strides = [1, 1]} : vector<2x128xf32> to vector<1x128xf32>
    %c0_4 = arith.constant 0 : index
    %c0_5 = arith.constant 0 : index
    %c0_6 = arith.constant 0 : index
    %5 = vector.load %arg6[%c0_4, %c0_5, %c0_6] : memref<1x3x128xf32, #tpu.memory_space<vmem>>, vector<1x1x128xf32>
    %6 = vector.shape_cast %5 : vector<1x1x128xf32> to vector<1x128xf32>
    %7 = vector.shape_cast %4 : vector<1x128xf32> to vector<1x1x128xf32>
    tpu.vector_store %arg6[%c0_4, %c0_5, %c0_6], %7 {strides = array<i32>} : memref<1x3x128xf32, #tpu.memory_space<vmem>>, vector<1x1x128xf32>,
    %cst_7 = arith.constant dense<0xFF800000> : vector<128xf32>
    %8 = vector.multi_reduction <maximumf>, %1, %cst_7 [0] : vector<4x128xf32> to vector<128xf32>
    %9 = vector.shape_cast %8 : vector<128xf32> to vector<1x128xf32>
    %c0_8 = arith.constant 0 : index
    %c1 = arith.constant 1 : index
    %c0_9 = arith.constant 0 : index
    %10 = vector.load %arg6[%c0_8, %c1, %c0_9] : memref<1x3x128xf32, #tpu.memory_space<vmem>>, vector<1x1x128xf32>
    %11 = vector.shape_cast %10 : vector<1x1x128xf32> to vector<1x128xf32>
    %12 = vector.shape_cast %9 : vector<1x128xf32> to vector<1x1x128xf32>
    tpu.vector_store %arg6[%c0_8, %c1, %c0_9], %12 {strides = array<i32>} : memref<1x3x128xf32, #tpu.memory_space<vmem>>, vector<1x1x128xf32>,
    %13 = vector.extract_strided_slice %3 {offsets = [1, 0], sizes = [1, 128], strides = [1, 1]} : vector<2x128xf32> to vector<1x128xf32>
    %c0_10 = arith.constant 0 : index
    %14 = memref.load %arg4[%c0_10] : memref<1xf32, #tpu.memory_space<smem>>
    %15 = vector.broadcast %14 : f32 to vector<1x128xf32>
    %16 = arith.addf %13, %15 : vector<1x128xf32>
    %c0_11 = arith.constant 0 : index
    %c2 = arith.constant 2 : index
    %c0_12 = arith.constant 0 : index
    %17 = vector.load %arg6[%c0_11, %c2, %c0_12] : memref<1x3x128xf32, #tpu.memory_space<vmem>>, vector<1x1x128xf32>
    %18 = vector.shape_cast %17 : vector<1x1x128xf32> to vector<1x128xf32>
    %19 = vector.shape_cast %16 : vector<1x128xf32> to vector<1x1x128xf32>
    tpu.vector_store %arg6[%c0_11, %c2, %c0_12], %19 {strides = array<i32>} : memref<1x3x128xf32, #tpu.memory_space<vmem>>, vector<1x1x128xf32>,
    %c0_13 = arith.constant 0 : index
    %c0_14 = arith.constant 0 : index
    %20 = vector.load %arg5[%c0_13, %c0_14] : memref<4x1xf32, #tpu.memory_space<vmem>>, vector<4x1xf32>
    %21 = vector.broadcast %20 : vector<4x1xf32> to vector<4x128xf32>
    %22 = arith.subf %1, %21 : vector<4x128xf32>
    %cst_15 = arith.constant dense<0.000000e+00> : vector<4xf32>
    %23 = vector.multi_reduction <add>, %22, %cst_15 [1] : vector<4x128xf32> to vector<4xf32>
    %24 = vector.shape_cast %23 : vector<4xf32> to vector<4x1xf32>
    %c0_16 = arith.constant 0 : index
    %c0_17 = arith.constant 0 : index
    %c0_18 = arith.constant 0 : index
    %c0_19 = arith.constant 0 : index
    %25 = vector.load %arg7[%c0_16, %c0_17, %c0_18, %c0_19] : memref<1x1x4x2xf32, #tpu.memory_space<vmem>>, vector<1x1x4x1xf32>
    %26 = vector.shape_cast %25 : vector<1x1x4x1xf32> to vector<4x1xf32>
    %27 = vector.shape_cast %24 : vector<4x1xf32> to vector<1x1x4x1xf32>
    tpu.vector_store %arg7[%c0_16, %c0_17, %c0_18, %c0_19], %27 {strides = array<i32>} : memref<1x1x4x2xf32, #tpu.memory_space<vmem>>, vector<1x1x4x1xf32>,
    %28 = arith.mulf %22, %22 : vector<4x128xf32>
    %cst_20 = arith.constant dense<0.000000e+00> : vector<4xf32>
    %29 = vector.multi_reduction <add>, %28, %cst_20 [1] : vector<4x128xf32> to vector<4xf32>
    %30 = vector.shape_cast %29 : vector<4xf32> to vector<4x1xf32>
    %c0_21 = arith.constant 0 : index
    %c0_22 = arith.constant 0 : index
    %c0_23 = arith.constant 0 : index
    %c1_24 = arith.constant 1 : index
    %31 = vector.load %arg7[%c0_21, %c0_22, %c0_23, %c1_24] : memref<1x1x4x2xf32, #tpu.memory_space<vmem>>, vector<1x1x4x1xf32>
    %32 = vector.shape_cast %31 : vector<1x1x4x1xf32> to vector<4x1xf32>
    %33 = vector.shape_cast %30 : vector<4x1xf32> to vector<1x1x4x1xf32>
    tpu.vector_store %arg7[%c0_21, %c0_22, %c0_23, %c1_24], %33 {strides = array<i32>} : memref<1x1x4x2xf32, #tpu.memory_space<vmem>>, vector<1x1x4x1xf32>,
    return
  }
  func.func @transform_0(%arg0: i32, %arg1: i32) -> (i32, i32, i32) {
    %c0_i32 = arith.constant 0 : i32
    %c0_i32_0 = arith.constant 0 : i32
    return %arg0, %c0_i32, %arg1 : i32, i32, i32
  }
  func.func @transform_1(%arg0: i32, %arg1: i32) -> (i32, i32) {
    %c0_i32 = arith.constant 0 : i32
    %c0_i32_0 = arith.constant 0 : i32
    %c0_i32_1 = arith.constant 0 : i32
    return %c0_i32, %c0_i32_0 : i32, i32
  }
  func.func @transform_2(%arg0: i32, %arg1: i32) -> i32 {
    %c0_i32 = arith.constant 0 : i32
    %c0_i32_0 = arith.constant 0 : i32
    return %c0_i32 : i32
  }
  func.func @transform_3(%arg0: i32, %arg1: i32) -> (i32, i32) {
    %c0_i32 = arith.constant 0 : i32
    %c0_i32_0 = arith.constant 0 : i32
    %c0_i32_1 = arith.constant 0 : i32
    return %c0_i32, %c0_i32_0 : i32, i32
  }
  func.func @transform_4(%arg0: i32, %arg1: i32) -> (i32, i32, i32) {
    %c0_i32 = arith.constant 0 : i32
    %c0_i32_0 = arith.constant 0 : i32
    return %arg0, %c0_i32, %arg1 : i32, i32, i32
  }
  func.func @transform_5(%arg0: i32, %arg1: i32) -> (i32, i32, i32, i32) {
    %c0_i32 = arith.constant 0 : i32
    %c0_i32_0 = arith.constant 0 : i32
    %c0_i32_1 = arith.constant 0 : i32
    return %arg0, %arg1, %c0_i32, %c0_i32_0 : i32, i32, i32, i32
  }
}

module attributes {stable_mosaic.version = 11 : i64} {
  func.func @_excite_kernel(%arg0: i32, %arg1: i32, %arg2: memref<1x4x128xf32, #tpu.memory_space<vmem>>, %arg3: memref<1x1x128xf32, #tpu.memory_space<vmem>>, %arg4: memref<4x1xf32, #tpu.memory_space<vmem>>, %arg5: memref<4x1xf32, #tpu.memory_space<vmem>>, %arg6: memref<1x4x128xf32, #tpu.memory_space<vmem>>) attributes {dimension_semantics = [#tpu.dimension_semantics<parallel>, #tpu.dimension_semantics<parallel>], iteration_bounds = array<i64: 2, 4>, scalar_prefetch = 0 : i64, scratch_operands = 0 : i64, tpu.core_type = #tpu.core_type<tc>, window_params = [{transform_indices = @transform_0, window_bounds = array<i64: 1, 4, 128>}, {transform_indices = @transform_1, window_bounds = array<i64: 1, 1, 128>}, {pipeline_mode = #tpu.pipeline_mode<synchronous>, transform_indices = @transform_2, window_bounds = array<i64: 4, 1>}, {pipeline_mode = #tpu.pipeline_mode<synchronous>, transform_indices = @transform_3, window_bounds = array<i64: 4, 1>}, {transform_indices = @transform_4, window_bounds = array<i64: 1, 4, 128>}]} {
    %c0 = arith.constant 0 : index
    %c0_0 = arith.constant 0 : index
    %c0_1 = arith.constant 0 : index
    %0 = vector.load %arg3[%c0, %c0_0, %c0_1] : memref<1x1x128xf32, #tpu.memory_space<vmem>>, vector<1x1x128xf32>
    %1 = vector.shape_cast %0 : vector<1x1x128xf32> to vector<1x128xf32>
    %cst = arith.constant 5.000000e-01 : f32
    %2 = vector.broadcast %cst : f32 to vector<1x128xf32>
    %3 = arith.mulf %2, %1 : vector<1x128xf32>
    %4 = math.tanh %3 : vector<1x128xf32>
    %cst_2 = arith.constant 1.000000e+00 : f32
    %5 = vector.broadcast %cst_2 : f32 to vector<1x128xf32>
    %6 = arith.addf %4, %5 : vector<1x128xf32>
    %cst_3 = arith.constant 5.000000e-01 : f32
    %7 = vector.broadcast %cst_3 : f32 to vector<1x128xf32>
    %8 = arith.mulf %7, %6 : vector<1x128xf32>
    %c0_4 = arith.constant 0 : index
    %c0_5 = arith.constant 0 : index
    %c0_6 = arith.constant 0 : index
    %9 = vector.load %arg2[%c0_4, %c0_5, %c0_6] : memref<1x4x128xf32, #tpu.memory_space<vmem>>, vector<1x4x128xf32>
    %10 = vector.shape_cast %9 : vector<1x4x128xf32> to vector<4x128xf32>
    %c0_7 = arith.constant 0 : index
    %c0_8 = arith.constant 0 : index
    %11 = vector.load %arg4[%c0_7, %c0_8] : memref<4x1xf32, #tpu.memory_space<vmem>>, vector<4x1xf32>
    %12 = vector.broadcast %11 : vector<4x1xf32> to vector<4x128xf32>
    %13 = arith.mulf %10, %12 : vector<4x128xf32>
    %c0_9 = arith.constant 0 : index
    %c0_10 = arith.constant 0 : index
    %14 = vector.load %arg5[%c0_9, %c0_10] : memref<4x1xf32, #tpu.memory_space<vmem>>, vector<4x1xf32>
    %15 = vector.broadcast %14 : vector<4x1xf32> to vector<4x128xf32>
    %16 = arith.addf %13, %15 : vector<4x128xf32>
    %17 = vector.broadcast %8 : vector<1x128xf32> to vector<4x128xf32>
    %18 = arith.mulf %16, %17 : vector<4x128xf32>
    %c0_11 = arith.constant 0 : index
    %c0_12 = arith.constant 0 : index
    %c0_13 = arith.constant 0 : index
    %19 = vector.load %arg6[%c0_11, %c0_12, %c0_13] : memref<1x4x128xf32, #tpu.memory_space<vmem>>, vector<1x4x128xf32>
    %20 = vector.shape_cast %19 : vector<1x4x128xf32> to vector<4x128xf32>
    %21 = vector.shape_cast %18 : vector<4x128xf32> to vector<1x4x128xf32>
    tpu.vector_store %arg6[%c0_11, %c0_12, %c0_13], %21 {strides = array<i32>} : memref<1x4x128xf32, #tpu.memory_space<vmem>>, vector<1x4x128xf32>,
    return
  }
  func.func @transform_0(%arg0: i32, %arg1: i32) -> (i32, i32, i32) {
    %c0_i32 = arith.constant 0 : i32
    %c0_i32_0 = arith.constant 0 : i32
    return %arg0, %c0_i32, %arg1 : i32, i32, i32
  }
  func.func @transform_1(%arg0: i32, %arg1: i32) -> (i32, i32, i32) {
    %c0_i32 = arith.constant 0 : i32
    %c0_i32_0 = arith.constant 0 : i32
    return %arg0, %c0_i32, %arg1 : i32, i32, i32
  }
  func.func @transform_2(%arg0: i32, %arg1: i32) -> (i32, i32) {
    %c0_i32 = arith.constant 0 : i32
    %c0_i32_0 = arith.constant 0 : i32
    %c0_i32_1 = arith.constant 0 : i32
    return %c0_i32, %c0_i32_0 : i32, i32
  }
  func.func @transform_3(%arg0: i32, %arg1: i32) -> (i32, i32) {
    %c0_i32 = arith.constant 0 : i32
    %c0_i32_0 = arith.constant 0 : i32
    %c0_i32_1 = arith.constant 0 : i32
    return %c0_i32, %c0_i32_0 : i32, i32
  }
  func.func @transform_4(%arg0: i32, %arg1: i32) -> (i32, i32, i32) {
    %c0_i32 = arith.constant 0 : i32
    %c0_i32_0 = arith.constant 0 : i32
    return %arg0, %c0_i32, %arg1 : i32, i32, i32
  }
}

</mosaic_0001>

<llo_original>
// kernel: spatial_se_3d.3
$region0: #{spatial_se_3d.3}
  #allocation0 [shape = 'u32[]', space=smem, size = 0x4, offset = 0x4, fixed_abs, tag = 'smem constant byte address 0x4 - core index']
  #allocation1 [shape = 'u32[144,128]{1,0:T(1,128)}', space=vmem, size = 0x12000, scoped, tag = 'internal scratch']
  %s0 = inlined_call_operand.vmem [shape: f32[2,4,512], index: 0, kind: input, shape index: {}]
  %s1 = inlined_call_operand.vmem [shape: f32[2,1,512], index: 1, kind: input, shape index: {}]
  %s2 = inlined_call_operand.vmem [shape: f32[4,1], index: 2, kind: input, shape index: {}]
  %s3 = inlined_call_operand.vmem [shape: f32[4,1], index: 3, kind: input, shape index: {}]
  %s4 = inlined_call_operand.vmem [shape: f32[2,4,512], index: 4, kind: output, shape index: {}]
  %s5 = sld [smem:[#allocation0]]
  $region49: #{spatial_se_3d.3} parent=0
    _
  %s7 = ssub.s32 1, %s5
  %s8 = scalar_select 0, %s7, %s5
  loop: start=0, step=1, limit=10
  $region2: #{spatial_se_3d.3} parent=0 // loop_pre_header
    _
  $region3: #{spatial_se_3d.3} parent=0 // loop_header
    %s10 = sphi 0, %s14
    %p11 = scmp.ge.s32.totalorder %s10, 10
    %s17 = sphi 0, %s29
    %s18 = sphi 0, %s25
    %s19 = sphi 0, %s17
    %s20 = sphi 0, %s18
    %s21 = sphi 0, %s19
    %s22 = sphi 0, %s20
    %s34 = sphi 0, %s36
    %s37 = sphi 0, %s34
    %s38 = sphi 0, %s37
    %s54 = sphi 0, %s38
    %s62 = sphi 0, %s64
    %s65 = sphi 0, %s62
    %s66 = sphi 0, %s65
    %s82 = sphi 0, %s66
    %s86 = sphi 0, %s86
    %s88 = sphi 0, %s86
    %s89 = sphi 0, %s88
    %s103 = sphi 0, %s89
    %s107 = sphi 0, %s107
    %s109 = sphi 0, %s107
    %s110 = sphi 0, %s109
    %s124 = sphi 0, %s110
    %s132 = sphi 0, %s134
    %s135 = sphi 0, %s132
    %s136 = sphi 0, %s135
    %s152 = sphi 0, %s136
  $region4: #{spatial_se_3d.3} parent=0 // loop_header_branch
    %13 = sbr.rel (%p11) target = $region8
  $region5: #{spatial_se_3d.3} parent=0 // loop_body
    %s15 = ssub.s32 %s10, 1
    %s16 = ssub.s32 %s10, 2
    %s23 = sadd.s32 1, %s18
    %p24 = scmp.ge.s32.totalorder %s23, 4
    %s25 = scalar_select %p24, 0, %s23
    %s26 = sadd.s32 1, %s17
    %s27 = scalar_select %p24, %s26, %s17
    %p28 = scmp.ge.s32.totalorder %s27, 2
    %s29 = scalar_select %p28, 0, %s27
    %s30 = ssub.s32 %s17, %s29
    %s31 = ssub.s32 %s18, %s25
    %s32 = sor.u32 %s30, %s31
    %p33 = scmp.eq.s32.totalorder %s32, 0
    %s35 = sadd.s32 %s34, 1
    %s36 = scalar_select %p33, %s34, %s35
    %p39 = pneg %p33
    %p40 = scmp.eq.s32.totalorder %s10, 7
    %p41 = por %p39, %p40
    %p42 = scmp.ne.s32.totalorder %s34, %s37
    %p43 = scmp.eq.s32.totalorder %s10, 0
    %p44 = por %p42, %p43
    %p45 = scmp.ne.s32.totalorder %s34, %s37
    %p46 = scmp.eq.s32.totalorder %s15, 7
    %p47 = por %p45, %p46
    %p48 = scmp.ne.s32.totalorder %s37, %s38
    %p49 = scmp.eq.s32.totalorder %s15, 0
    %p50 = por %p48, %p49
    %p51 = scmp.ne.s32.totalorder %s37, %s38
    %p52 = scmp.eq.s32.totalorder %s16, 7
    %p53 = por %p51, %p52
    %p55 = scmp.ne.s32.totalorder %s38, %s54
    %p56 = scmp.eq.s32.totalorder %s16, 0
    %p57 = por %p55, %p56
    %s58 = ssub.s32 %s17, %s29
    %s59 = ssub.s32 %s18, %s25
    %s60 = sor.u32 %s58, %s59
    %p61 = scmp.eq.s32.totalorder %s60, 0
    %s63 = sadd.s32 %s62, 1
    %s64 = scalar_select %p61, %s62, %s63
    %p67 = pneg %p61
    %p68 = scmp.eq.s32.totalorder %s10, 7
    %p69 = por %p67, %p68
    %p70 = scmp.ne.s32.totalorder %s62, %s65
    %p71 = scmp.eq.s32.totalorder %s10, 0
    %p72 = por %p70, %p71
    %p73 = scmp.ne.s32.totalorder %s62, %s65
    %p74 = scmp.eq.s32.totalorder %s15, 7
    %p75 = por %p73, %p74
    %p76 = scmp.ne.s32.totalorder %s65, %s66
    %p77 = scmp.eq.s32.totalorder %s15, 0
    %p78 = por %p76, %p77
    %p79 = scmp.ne.s32.totalorder %s65, %s66
    %p80 = scmp.eq.s32.totalorder %s16, 7
    %p81 = por %p79, %p80
    %p83 = scmp.ne.s32.totalorder %s66, %s82
    %p84 = scmp.eq.s32.totalorder %s16, 0
    %p85 = por %p83, %p84
    %s87 = sadd.s32 %s86, 1
    %p90 = scmp.eq.s32.totalorder %s10, 7
    %p91 = scmp.ne.s32.totalorder %s86, %s88
    %p92 = scmp.eq.s32.totalorder %s10, 0
    %p93 = por %p91, %p92
    %p94 = scmp.ne.s32.totalorder %s86, %s88
    %p95 = scmp.eq.s32.totalorder %s15, 7
    %p96 = por %p94, %p95
    %p97 = scmp.ne.s32.totalorder %s88, %s89
    %p98 = scmp.eq.s32.totalorder %s15, 0
    %p99 = por %p97, %p98
    %p100 = scmp.ne.s32.totalorder %s88, %s89
    %p101 = scmp.eq.s32.totalorder %s16, 7
    %p102 = por %p100, %p101
    %p104 = scmp.ne.s32.totalorder %s89, %s103
    %p105 = scmp.eq.s32.totalorder %s16, 0
    %p106 = por %p104, %p105
    %s108 = sadd.s32 %s107, 1
    %p111 = scmp.eq.s32.totalorder %s10, 7
    %p112 = scmp.ne.s32.totalorder %s107, %s109
    %p113 = scmp.eq.s32.totalorder %s10, 0
    %p114 = por %p112, %p113
    %p115 = scmp.ne.s32.totalorder %s107, %s109
    %p116 = scmp.eq.s32.totalorder %s15, 7
    %p117 = por %p115, %p116
    %p118 = scmp.ne.s32.totalorder %s109, %s110
    %p119 = scmp.eq.s32.totalorder %s15, 0
    %p120 = por %p118, %p119
    %p121 = scmp.ne.s32.totalorder %s109, %s110
    %p122 = scmp.eq.s32.totalorder %s16, 7
    %p123 = por %p121, %p122
    %p125 = scmp.ne.s32.totalorder %s110, %s124
    %p126 = scmp.eq.s32.totalorder %s16, 0
    %p127 = por %p125, %p126
    %s128 = ssub.s32 %s17, %s29
    %s129 = ssub.s32 %s18, %s25
    %s130 = sor.u32 %s128, %s129
    %p131 = scmp.eq.s32.totalorder %s130, 0
    %s133 = sadd.s32 %s132, 1
    %s134 = scalar_select %p131, %s132, %s133
    %p137 = pneg %p131
    %p138 = scmp.eq.s32.totalorder %s10, 7
    %p139 = por %p137, %p138
    %p140 = scmp.ne.s32.totalorder %s132, %s135
    %p141 = scmp.eq.s32.totalorder %s10, 0
    %p142 = por %p140, %p141
    %p143 = scmp.ne.s32.totalorder %s132, %s135
    %p144 = scmp.eq.s32.totalorder %s15, 7
    %p145 = por %p143, %p144
    %p146 = scmp.ne.s32.totalorder %s135, %s136
    %p147 = scmp.eq.s32.totalorder %s15, 0
    %p148 = por %p146, %p147
    %p149 = scmp.ne.s32.totalorder %s135, %s136
    %p150 = scmp.eq.s32.totalorder %s16, 7
    %p151 = por %p149, %p150
    %p153 = scmp.ne.s32.totalorder %s136, %s152
    %p154 = scmp.eq.s32.totalorder %s16, 0
    %p155 = por %p153, %p154
    %p156 = scmp.le.s32.totalorder 1, %s10
    %p157 = scmp.lt.s32.totalorder %s10, 9
    %p158 = pnand %p156, %p157
    %p159 = pneg %p158
    // Predicated region
    $region9: #{spatial_se_3d.3} parent=5 // pred_check
      _
    $region10: #{spatial_se_3d.3} parent=5 // pred_check_branch
      %161 = sbr.rel (%p158) target = $region12
    $region11: #{spatial_se_3d.3} parent=5 // pred_region
      %s162 = ssub.s32 %s10, 1
      // Predicated region
      $region13: #{spatial_se_3d.3} parent=11 // pred_check
        %p163 = pneg %p99
      $region14: #{spatial_se_3d.3} parent=11 // pred_check_branch
        %165 = sbr.rel (%p163) target = $region16
      $region15: #{spatial_se_3d.3} parent=11 // pred_region
        _
      $region16: #{spatial_se_3d.3} parent=11 // pred_fallthru
        _
      // Predicated region
      $region17: #{spatial_se_3d.3} parent=11 // pred_check
        %p166 = pneg %p120
      $region18: #{spatial_se_3d.3} parent=11 // pred_check_branch
        %168 = sbr.rel (%p166) target = $region20
      $region19: #{spatial_se_3d.3} parent=11 // pred_region
        _
      $region20: #{spatial_se_3d.3} parent=11 // pred_fallthru
        _
    $region12: #{spatial_se_3d.3} parent=5 // pred_fallthru
      _
    %p169 = scmp.lt.s32.totalorder %s10, 8
    // Predicated region
    $region21: #{spatial_se_3d.3} parent=5 // pred_check
      %p170 = pneg %p169
    $region22: #{spatial_se_3d.3} parent=5 // pred_check_branch
      %172 = sbr.rel (%p170) target = $region24
    $region23: #{spatial_se_3d.3} parent=5 // pred_region
      // Predicated region
      $region25: #{spatial_se_3d.3} parent=23 // pred_check
        %p173 = pneg %p44
      $region26: #{spatial_se_3d.3} parent=23 // pred_check_branch
        %175 = sbr.rel (%p173) target = $region28
      $region27: #{spatial_se_3d.3} parent=23 // pred_region
        %p176 = scmp.lt.s32.totalorder %s17, 1
        %s177 = scalar_select %p176, %s17, 1
        %p178 = scmp.lt.s32.totalorder %s18, 3
        %s179 = scalar_select %p178, %s18, 3
        %s180 = smul.addr %s177, 4
        %s181 = sadd.s32 %s179, %s180
        %s182 = smul.addr %s181, 4
        %s183 = scalar_lea.vmem %s0, %s182
      $region28: #{spatial_se_3d.3} parent=23 // pred_fallthru
        _
      // Predicated region
      $region29: #{spatial_se_3d.3} parent=23 // pred_check
        %p184 = pneg %p72
      $region30: #{spatial_se_3d.3} parent=23 // pred_check_branch
        %186 = sbr.rel (%p184) target = $region32
      $region31: #{spatial_se_3d.3} parent=23 // pred_region
        %p187 = scmp.lt.s32.totalorder %s17, 1
        %s188 = scalar_select %p187, %s17, 1
        %p189 = scmp.lt.s32.totalorder %s18, 3
        %s190 = scalar_select %p189, %s18, 3
        %s191 = smul.addr %s188, 4
        %s192 = sadd.s32 %s190, %s191
        %s193 = scalar_lea.vmem %s1, %s192
      $region32: #{spatial_se_3d.3} parent=23 // pred_fallthru
        _
    $region24: #{spatial_se_3d.3} parent=5 // pred_fallthru
      _
    %p194 = scmp.le.s32.totalorder 1, %s10
    %p195 = scmp.lt.s32.totalorder %s10, 9
    %p196 = pnand %p194, %p195
    %p197 = pneg %p196
    // Predicated region
    $region33: #{spatial_se_3d.3} parent=5 // pred_check
      _
    $region34: #{spatial_se_3d.3} parent=5 // pred_check_branch
      %199 = sbr.rel (%p196) target = $region36
    $region35: #{spatial_se_3d.3} parent=5 // pred_region
      %s200 = ssub.s32 %s10, 1
      %p201 = scmp.lt.s32.totalorder %s19, 1
      %s202 = scalar_select %p201, %s19, 1
      %p203 = scmp.lt.s32.totalorder %s20, 3
      %s204 = scalar_select %p203, %s20, 3
      %s205 = smul.addr %s202, 4
      %s206 = sadd.s32 %s204, %s205
      %s207 = smul.addr %s206, 4
      %s208 = scalar_lea.vmem %s0, %s207
      %p209 = pneg %p50
      %p210 = pneg %p47
      %p211 = scmp.lt.s32.totalorder %s19, 1
      %s212 = scalar_select %p211, %s19, 1
      %p213 = scmp.lt.s32.totalorder %s20, 3
      %s214 = scalar_select %p213, %s20, 3
      %s215 = smul.addr %s212, 4
      %s216 = sadd.s32 %s214, %s215
      %s217 = scalar_lea.vmem %s1, %s216
      %p218 = pneg %p78
      %p219 = pneg %p75
      %p220 = pneg %p99
      %p221 = pneg %p96
      %p222 = pneg %p120
      %p223 = pneg %p117
      %p224 = pneg %p148
      %p225 = pneg %p145
      %p226 = scmp.lt.s32.totalorder %s19, 1
      %s227 = scalar_select %p226, %s19, 1
      %p228 = scmp.lt.s32.totalorder %s20, 3
      %s229 = scalar_select %p228, %s20, 3
      %s230 = smul.addr %s227, 4
      %s231 = sadd.s32 %s229, %s230
      %s232 = smul.addr %s231, 4
      %s233 = scalar_lea.vmem %s4, %s232
      %p234 = scmp.lt.s32.totalorder %s19, 1
      %s235 = scalar_select %p234, %s19, 1
      %p236 = scmp.lt.s32.totalorder %s20, 3
      %s237 = scalar_select %p236, %s20, 3
      %s238 = smul.addr %s235, 4
      %s239 = sadd.s32 %s237, %s238
      %s240 = smul.addr %s239, 4
      %s241 = scalar_lea.vmem %s0, %s240
      %p242 = scmp.lt.s32.totalorder %s19, 1
      %s243 = scalar_select %p242, %s19, 1
      %p244 = scmp.lt.s32.totalorder %s20, 3
      %s245 = scalar_select %p244, %s20, 3
      %s246 = smul.addr %s243, 4
      %s247 = sadd.s32 %s245, %s246
      %s248 = scalar_lea.vmem %s1, %s247
      %p249 = scmp.lt.s32.totalorder %s19, 1
      %s250 = scalar_select %p249, %s19, 1
      %p251 = scmp.lt.s32.totalorder %s20, 3
      %s252 = scalar_select %p251, %s20, 3
      %s253 = smul.addr %s250, 4
      %s254 = sadd.s32 %s252, %s253
      %s255 = smul.addr %s254, 4
      %s256 = scalar_lea.vmem %s4, %s255
      %v257 = vld [vmem:[%s248] sm:$0x1]
      %v258 = vmul.f32 %v257, 0.5
      %v259 = vtanh.pop %v258
      %v260 = vadd.f32 %v259, 1.0
      %v261 = vmul.f32 %v260, 0.5
      %v262 = vld [vmem:[%s241] sm:$0xf]
      %v263 = vld [vmem:[%s2] sm:$0xf]
      %265 = vset.pattern.permute.xlu0 0
      %266 = vperm.xlu0 %265, %v263
      %v267 = vpop.permute.xlu0 %266
      %v269 = vmul.f32 %v262, %v267
      %v270 = vld [vmem:[%s3] sm:$0xf]
      %272 = vset.pattern.permute.xlu0 0
      %273 = vperm.xlu0 %272, %v270
      %v274 = vpop.permute.xlu0 %273
      %v276 = vadd.f32 %v269, %v274
      %v278 = vlaneseq
      %v279 = vshrl.u32 %v278, 7
      %v280 = vsub.s32 0, %v279
      %v281 = vrot.slane %v261, %v280
      %v283 = vmul.f32 %v276, %v281
      %284 = vst [vmem:[%s256] sm:$0xf] %v283
      %p285 = scmp.lt.s32.totalorder %s19, 1
      %s286 = scalar_select %p285, %s19, 1
      %p287 = scmp.lt.s32.totalorder %s20, 3
      %s288 = scalar_select %p287, %s20, 3
      %s289 = smul.addr %s286, 4
      %s290 = sadd.s32 %s288, %s289
      %s291 = smul.addr %s290, 4
      %s292 = scalar_lea.vmem %s4, %s291
      // Predicated region
      $region37: #{spatial_se_3d.3} parent=35 // pred_check
        %p293 = pneg %p145
      $region38: #{spatial_se_3d.3} parent=35 // pred_check_branch
        %295 = sbr.rel (%p293) target = $region40
      $region39: #{spatial_se_3d.3} parent=35 // pred_region
        _
      $region40: #{spatial_se_3d.3} parent=35 // pred_fallthru
        _
    $region36: #{spatial_se_3d.3} parent=5 // pred_fallthru
      _
    %p296 = scmp.le.s32.totalorder 2, %s10
    // Predicated region
    $region41: #{spatial_se_3d.3} parent=5 // pred_check
      %p297 = pneg %p296
    $region42: #{spatial_se_3d.3} parent=5 // pred_check_branch
      %299 = sbr.rel (%p297) target = $region44
    $region43: #{spatial_se_3d.3} parent=5 // pred_region
      %s300 = ssub.s32 %s10, 2
      // Predicated region
      $region45: #{spatial_se_3d.3} parent=43 // pred_check
        %p301 = pneg %p151
      $region46: #{spatial_se_3d.3} parent=43 // pred_check_branch
        %303 = sbr.rel (%p301) target = $region48
      $region47: #{spatial_se_3d.3} parent=43 // pred_region
        %p304 = scmp.lt.s32.totalorder %s21, 1
        %s305 = scalar_select %p304, %s21, 1
        %p306 = scmp.lt.s32.totalorder %s22, 3
        %s307 = scalar_select %p306, %s22, 3
        %s308 = smul.addr %s305, 4
        %s309 = sadd.s32 %s307, %s308
        %s310 = smul.addr %s309, 4
        %s311 = scalar_lea.vmem %s4, %s310
      $region48: #{spatial_se_3d.3} parent=43 // pred_fallthru
        _
    $region44: #{spatial_se_3d.3} parent=5 // pred_fallthru
      _
  $region6: #{spatial_se_3d.3} parent=0 // loop_footer
    %s14 = sadd.s32 1, %s10
  $region7: #{spatial_se_3d.3} parent=0 // loop_footer_branch
    %9 = sbr.rel target = $region3
  $region8: #{spatial_se_3d.3} parent=0 // loop_exit
    _

// kernel: spatial_se_3d.2
$region0: #{spatial_se_3d.2}
  #allocation0 [shape = 'u32[]', space=smem, size = 0x4, offset = 0x4, fixed_abs, tag = 'smem constant byte address 0x4 - core index']
  #allocation1 [shape = 'u32[144,128]{1,0:T(1,128)}', space=vmem, size = 0x12000, scoped, tag = 'internal scratch']
  #allocation2 [shape = 'f32[1]{0:T(128)S(6)}', space=smem, size = 0x200, scoped, tag = 'scoped memory for spatial_se_3d.2']
  %s0 = inlined_call_operand.vmem [shape: f32[2,4,512], index: 0, kind: input, shape index: {}]
  %s1 = inlined_call_operand.vmem [shape: f32[2,4], index: 1, kind: input, shape index: {}]
  %s2 = inlined_call_operand.<no memory space> [shape: f32[1], index: 2, kind: input, shape index: {}]
  %s3 = inlined_call_operand.vmem [shape: f32[4,1], index: 3, kind: input, shape index: {}]
  %s4 = inlined_call_operand.vmem [shape: f32[2,3,512], index: 4, kind: output, shape index: {0}]
  %s5 = inlined_call_operand.vmem [shape: f32[2,4,4,2], index: 5, kind: output, shape index: {1}]
  %6 = xla_tuple %s4, %s5
  %s7 = sld [smem:[#allocation0]]
  $region57: #{spatial_se_3d.2} parent=0
    _
  %s9 = ssub.s32 1, %s7
  %s10 = scalar_select 0, %s9, %s7
  %11 = sst [smem:[#allocation2]] %s2
  loop: start=0, step=1, limit=10
  $region2: #{spatial_se_3d.2} parent=0 // loop_pre_header
    _
  $region3: #{spatial_se_3d.2} parent=0 // loop_header
    %s13 = sphi 0, %s17
    %p14 = scmp.ge.s32.totalorder %s13, 10
    %s20 = sphi 0, %s32
    %s21 = sphi 0, %s28
    %s22 = sphi 0, %s20
    %s23 = sphi 0, %s21
    %s24 = sphi 0, %s22
    %s25 = sphi 0, %s23
    %s37 = sphi 0, %s39
    %s40 = sphi 0, %s37
    %s41 = sphi 0, %s40
    %s57 = sphi 0, %s41
    %s61 = sphi 0, %s61
    %s63 = sphi 0, %s61
    %s64 = sphi 0, %s63
    %s78 = sphi 0, %s64
    %s82 = sphi 0, %s82
    %s84 = sphi 0, %s82
    %s85 = sphi 0, %s84
    %s99 = sphi 0, %s85
    %s103 = sphi 0, %s103
    %s105 = sphi 0, %s103
    %s106 = sphi 0, %s105
    %s120 = sphi 0, %s106
    %s128 = sphi 0, %s130
    %s131 = sphi 0, %s128
    %s132 = sphi 0, %s131
    %s148 = sphi 0, %s132
    %s156 = sphi 0, %s158
    %s159 = sphi 0, %s156
    %s160 = sphi 0, %s159
    %s176 = sphi 0, %s160
  $region4: #{spatial_se_3d.2} parent=0 // loop_header_branch
    %16 = sbr.rel (%p14) target = $region8
  $region5: #{spatial_se_3d.2} parent=0 // loop_body
    %s18 = ssub.s32 %s13, 1
    %s19 = ssub.s32 %s13, 2
    %s26 = sadd.s32 1, %s21
    %p27 = scmp.ge.s32.totalorder %s26, 4
    %s28 = scalar_select %p27, 0, %s26
    %s29 = sadd.s32 1, %s20
    %s30 = scalar_select %p27, %s29, %s20
    %p31 = scmp.ge.s32.totalorder %s30, 2
    %s32 = scalar_select %p31, 0, %s30
    %s33 = ssub.s32 %s20, %s32
    %s34 = ssub.s32 %s21, %s28
    %s35 = sor.u32 %s33, %s34
    %p36 = scmp.eq.s32.totalorder %s35, 0
    %s38 = sadd.s32 %s37, 1
    %s39 = scalar_select %p36, %s37, %s38
    %p42 = pneg %p36
    %p43 = scmp.eq.s32.totalorder %s13, 7
    %p44 = por %p42, %p43
    %p45 = scmp.ne.s32.totalorder %s37, %s40
    %p46 = scmp.eq.s32.totalorder %s13, 0
    %p47 = por %p45, %p46
    %p48 = scmp.ne.s32.totalorder %s37, %s40
    %p49 = scmp.eq.s32.totalorder %s18, 7
    %p50 = por %p48, %p49
    %p51 = scmp.ne.s32.totalorder %s40, %s41
    %p52 = scmp.eq.s32.totalorder %s18, 0
    %p53 = por %p51, %p52
    %p54 = scmp.ne.s32.totalorder %s40, %s41
    %p55 = scmp.eq.s32.totalorder %s19, 7
    %p56 = por %p54, %p55
    %p58 = scmp.ne.s32.totalorder %s41, %s57
    %p59 = scmp.eq.s32.totalorder %s19, 0
    %p60 = por %p58, %p59
    %s62 = sadd.s32 %s61, 1
    %p65 = scmp.eq.s32.totalorder %s13, 7
    %p66 = scmp.ne.s32.totalorder %s61, %s63
    %p67 = scmp.eq.s32.totalorder %s13, 0
    %p68 = por %p66, %p67
    %p69 = scmp.ne.s32.totalorder %s61, %s63
    %p70 = scmp.eq.s32.totalorder %s18, 7
    %p71 = por %p69, %p70
    %p72 = scmp.ne.s32.totalorder %s63, %s64
    %p73 = scmp.eq.s32.totalorder %s18, 0
    %p74 = por %p72, %p73
    %p75 = scmp.ne.s32.totalorder %s63, %s64
    %p76 = scmp.eq.s32.totalorder %s19, 7
    %p77 = por %p75, %p76
    %p79 = scmp.ne.s32.totalorder %s64, %s78
    %p80 = scmp.eq.s32.totalorder %s19, 0
    %p81 = por %p79, %p80
    %s83 = sadd.s32 %s82, 1
    %p86 = scmp.eq.s32.totalorder %s13, 7
    %p87 = scmp.ne.s32.totalorder %s82, %s84
    %p88 = scmp.eq.s32.totalorder %s13, 0
    %p89 = por %p87, %p88
    %p90 = scmp.ne.s32.totalorder %s82, %s84
    %p91 = scmp.eq.s32.totalorder %s18, 7
    %p92 = por %p90, %p91
    %p93 = scmp.ne.s32.totalorder %s84, %s85
    %p94 = scmp.eq.s32.totalorder %s18, 0
    %p95 = por %p93, %p94
    %p96 = scmp.ne.s32.totalorder %s84, %s85
    %p97 = scmp.eq.s32.totalorder %s19, 7
    %p98 = por %p96, %p97
    %p100 = scmp.ne.s32.totalorder %s85, %s99
    %p101 = scmp.eq.s32.totalorder %s19, 0
    %p102 = por %p100, %p101
    %s104 = sadd.s32 %s103, 1
    %p107 = scmp.eq.s32.totalorder %s13, 7
    %p108 = scmp.ne.s32.totalorder %s103, %s105
    %p109 = scmp.eq.s32.totalorder %s13, 0
    %p110 = por %p108, %p109
    %p111 = scmp.ne.s32.totalorder %s103, %s105
    %p112 = scmp.eq.s32.totalorder %s18, 7
    %p113 = por %p111, %p112
    %p114 = scmp.ne.s32.totalorder %s105, %s106
    %p115 = scmp.eq.s32.totalorder %s18, 0
    %p116 = por %p114, %p115
    %p117 = scmp.ne.s32.totalorder %s105, %s106
    %p118 = scmp.eq.s32.totalorder %s19, 7
    %p119 = por %p117, %p118
    %p121 = scmp.ne.s32.totalorder %s106, %s120
    %p122 = scmp.eq.s32.totalorder %s19, 0
    %p123 = por %p121, %p122
    %s124 = ssub.s32 %s20, %s32
    %s125 = ssub.s32 %s21, %s28
    %s126 = sor.u32 %s124, %s125
    %p127 = scmp.eq.s32.totalorder %s126, 0
    %s129 = sadd.s32 %s128, 1
    %s130 = scalar_select %p127, %s128, %s129
    %p133 = pneg %p127
    %p134 = scmp.eq.s32.totalorder %s13, 7
    %p135 = por %p133, %p134
    %p136 = scmp.ne.s32.totalorder %s128, %s131
    %p137 = scmp.eq.s32.totalorder %s13, 0
    %p138 = por %p136, %p137
    %p139 = scmp.ne.s32.totalorder %s128, %s131
    %p140 = scmp.eq.s32.totalorder %s18, 7
    %p141 = por %p139, %p140
    %p142 = scmp.ne.s32.totalorder %s131, %s132
    %p143 = scmp.eq.s32.totalorder %s18, 0
    %p144 = por %p142, %p143
    %p145 = scmp.ne.s32.totalorder %s131, %s132
    %p146 = scmp.eq.s32.totalorder %s19, 7
    %p147 = por %p145, %p146
    %p149 = scmp.ne.s32.totalorder %s132, %s148
    %p150 = scmp.eq.s32.totalorder %s19, 0
    %p151 = por %p149, %p150
    %s152 = ssub.s32 %s20, %s32
    %s153 = ssub.s32 %s21, %s28
    %s154 = sor.u32 %s152, %s153
    %p155 = scmp.eq.s32.totalorder %s154, 0
    %s157 = sadd.s32 %s156, 1
    %s158 = scalar_select %p155, %s156, %s157
    %p161 = pneg %p155
    %p162 = scmp.eq.s32.totalorder %s13, 7
    %p163 = por %p161, %p162
    %p164 = scmp.ne.s32.totalorder %s156, %s159
    %p165 = scmp.eq.s32.totalorder %s13, 0
    %p166 = por %p164, %p165
    %p167 = scmp.ne.s32.totalorder %s156, %s159
    %p168 = scmp.eq.s32.totalorder %s18, 7
    %p169 = por %p167, %p168
    %p170 = scmp.ne.s32.totalorder %s159, %s160
    %p171 = scmp.eq.s32.totalorder %s18, 0
    %p172 = por %p170, %p171
    %p173 = scmp.ne.s32.totalorder %s159, %s160
    %p174 = scmp.eq.s32.totalorder %s19, 7
    %p175 = por %p173, %p174
    %p177 = scmp.ne.s32.totalorder %s160, %s176
    %p178 = scmp.eq.s32.totalorder %s19, 0
    %p179 = por %p177, %p178
    %p180 = scmp.le.s32.totalorder 1, %s13
    %p181 = scmp.lt.s32.totalorder %s13, 9
    %p182 = pnand %p180, %p181
    %p183 = pneg %p182
    // Predicated region
    $region9: #{spatial_se_3d.2} parent=5 // pred_check
      _
    $region10: #{spatial_se_3d.2} parent=5 // pred_check_branch
      %185 = sbr.rel (%p182) target = $region12
    $region11: #{spatial_se_3d.2} parent=5 // pred_region
      %s186 = ssub.s32 %s13, 1
      // Predicated region
      $region13: #{spatial_se_3d.2} parent=11 // pred_check
        %p187 = pneg %p74
      $region14: #{spatial_se_3d.2} parent=11 // pred_check_branch
        %189 = sbr.rel (%p187) target = $region16
      $region15: #{spatial_se_3d.2} parent=11 // pred_region
        _
      $region16: #{spatial_se_3d.2} parent=11 // pred_fallthru
        _
      // Predicated region
      $region17: #{spatial_se_3d.2} parent=11 // pred_check
        %p190 = pneg %p95
      $region18: #{spatial_se_3d.2} parent=11 // pred_check_branch
        %192 = sbr.rel (%p190) target = $region20
      $region19: #{spatial_se_3d.2} parent=11 // pred_region
        _
      $region20: #{spatial_se_3d.2} parent=11 // pred_fallthru
        _
      // Predicated region
      $region21: #{spatial_se_3d.2} parent=11 // pred_check
        %p193 = pneg %p116
      $region22: #{spatial_se_3d.2} parent=11 // pred_check_branch
        %195 = sbr.rel (%p193) target = $region24
      $region23: #{spatial_se_3d.2} parent=11 // pred_region
        _
      $region24: #{spatial_se_3d.2} parent=11 // pred_fallthru
        _
    $region12: #{spatial_se_3d.2} parent=5 // pred_fallthru
      _
    %p196 = scmp.lt.s32.totalorder %s13, 8
    // Predicated region
    $region25: #{spatial_se_3d.2} parent=5 // pred_check
      %p197 = pneg %p196
    $region26: #{spatial_se_3d.2} parent=5 // pred_check_branch
      %199 = sbr.rel (%p197) target = $region28
    $region27: #{spatial_se_3d.2} parent=5 // pred_region
      // Predicated region
      $region29: #{spatial_se_3d.2} parent=27 // pred_check
        %p200 = pneg %p47
      $region30: #{spatial_se_3d.2} parent=27 // pred_check_branch
        %202 = sbr.rel (%p200) target = $region32
      $region31: #{spatial_se_3d.2} parent=27 // pred_region
        %p203 = scmp.lt.s32.totalorder %s20, 1
        %s204 = scalar_select %p203, %s20, 1
        %p205 = scmp.lt.s32.totalorder %s21, 3
        %s206 = scalar_select %p205, %s21, 3
        %s207 = smul.addr %s204, 4
        %s208 = sadd.s32 %s206, %s207
        %s209 = smul.addr %s208, 4
        %s210 = scalar_lea.vmem %s0, %s209
      $region32: #{spatial_se_3d.2} parent=27 // pred_fallthru
        _
    $region28: #{spatial_se_3d.2} parent=5 // pred_fallthru
      _
    %p211 = scmp.le.s32.totalorder 1, %s13
    %p212 = scmp.lt.s32.totalorder %s13, 9
    %p213 = pnand %p211, %p212
    %p214 = pneg %p213
    // Predicated region
    $region33: #{spatial_se_3d.2} parent=5 // pred_check
      _
    $region34: #{spatial_se_3d.2} parent=5 // pred_check_branch
      %216 = sbr.rel (%p213) target = $region36
    $region35: #{spatial_se_3d.2} parent=5 // pred_region
      %s217 = ssub.s32 %s13, 1
      %p218 = scmp.lt.s32.totalorder %s22, 1
      %s219 = scalar_select %p218, %s22, 1
      %p220 = scmp.lt.s32.totalorder %s23, 3
      %s221 = scalar_select %p220, %s23, 3
      %s222 = smul.addr %s219, 4
      %s223 = sadd.s32 %s221, %s222
      %s224 = smul.addr %s223, 4
      %s225 = scalar_lea.vmem %s0, %s224
      %p226 = pneg %p53
      %p227 = pneg %p50
      %p228 = pneg %p74
      %p229 = pneg %p71
      %p230 = pneg %p95
      %p231 = pneg %p92
      %p232 = pneg %p116
      %p233 = pneg %p113
      %p234 = pneg %p144
      %p235 = pneg %p141
      %p236 = scmp.lt.s32.totalorder %s22, 1
      %s237 = scalar_select %p236, %s22, 1
      %p238 = scmp.lt.s32.totalorder %s23, 3
      %s239 = scalar_select %p238, %s23, 3
      %s240 = smul.addr %s237, 4
      %s241 = sadd.s32 %s239, %s240
      %s242 = smul.addr %s241, 4
      %s243 = scalar_lea.vmem %s4, %s242
      %p244 = pneg %p172
      %p245 = pneg %p169
      %p246 = scmp.lt.s32.totalorder %s22, 1
      %s247 = scalar_select %p246, %s22, 1
      %p248 = scmp.lt.s32.totalorder %s23, 3
      %s249 = scalar_select %p248, %s23, 3
      %s250 = smul.addr %s247, 4
      %s251 = sadd.s32 %s249, %s250
      %s252 = smul.addr %s251, 4
      %s253 = scalar_lea.vmem %s5, %s252
      %p254 = scmp.lt.s32.totalorder %s22, 1
      %s255 = scalar_select %p254, %s22, 1
      %p256 = scmp.lt.s32.totalorder %s23, 3
      %s257 = scalar_select %p256, %s23, 3
      %s258 = smul.addr %s255, 4
      %s259 = sadd.s32 %s257, %s258
      %s260 = smul.addr %s259, 4
      %s261 = scalar_lea.vmem %s0, %s260
      %p262 = scmp.lt.s32.totalorder %s22, 1
      %s263 = scalar_select %p262, %s22, 1
      %p264 = scmp.lt.s32.totalorder %s23, 3
      %s265 = scalar_select %p264, %s23, 3
      %s266 = smul.addr %s263, 4
      %s267 = sadd.s32 %s265, %s266
      %s268 = smul.addr %s267, 4
      %s269 = scalar_lea.vmem %s4, %s268
      %p270 = scmp.lt.s32.totalorder %s22, 1
      %s271 = scalar_select %p270, %s22, 1
      %p272 = scmp.lt.s32.totalorder %s23, 3
      %s273 = scalar_select %p272, %s23, 3
      %s274 = smul.addr %s271, 4
      %s275 = sadd.s32 %s273, %s274
      %s276 = smul.addr %s275, 4
      %s277 = scalar_lea.vmem %s5, %s276
      %v278 = vld [vmem:[%s261] sm:$0xf]
      %v279 = vld [vmem:[%s1] sm:$0x3]
      %vm280 = vcmask 31744
      %v282 = vsel %vm280, %v279, 0
      %vm284 = vcmask 1043456
      %v286 = vsel %vm284, %v278, 0
      %288 = vmatprep.subr.mxu0 0.0
      %289 = vmatpush1.msra.mxu0 0.0
      %290 = vmatprep.subr.mxu0 0.0
      %291 = vmatpush1.msra.mxu0 0.0
      %292 = vmatprep.subr.mxu0 0.0
      %293 = vmatpush1.msra.mxu0 0.0
      %294 = vmatprep.subr.mxu0 0.0
      %295 = vmatpush1.msra.mxu0 0.0
      %296 = vmatprep.subr.mxu0 0.0
      %297 = vmatpush1.msra.mxu0 0.0
      %298 = vmatprep.subr.mxu0 0.0
      %299 = vmatpush1.msra.mxu0 0.0
      %300 = vmatprep.subr.mxu0 0.0
      %301 = vmatpush1.msra.mxu0 0.0
      %302 = vmatprep.subr.mxu0 0.0
      %303 = vmatpush1.msra.mxu0 0.0
      %304 = vmatprep.subr.mxu0 0.0
      %305 = vmatpush1.msra.mxu0 0.0
      %306 = vmatprep.subr.mxu0 0.0
      %307 = vmatpush1.msra.mxu0 0.0
      %308 = vmatprep.subr.mxu0 0.0
      %309 = vmatpush1.msra.mxu0 0.0
      %310 = vmatprep.subr.mxu0 0.0
      %311 = vmatpush1.msra.mxu0 0.0
      %312 = vmatprep.subr.mxu0 0.0
      %313 = vmatpush1.msra.mxu0 0.0
      %314 = vmatprep.subr.mxu0 0.0
      %315 = vmatpush1.msra.mxu0 0.0
      %316 = vmatprep.subr.mxu0 0.0
      %317 = vmatpush1.msra.mxu0 0.0
      %318 = vmatprep.subr.mxu0 0.0
      %v319 = vand.u32 %v286, 4294901760
      %320 = vmatpush1.msra.mxu0 %v319
      %321 = vmatprep.subr.mxu0 0.0
      %322 = vmatpush2.msra.mxu0 0.0
      %323 = vmatprep.subr.mxu0 0.0
      %324 = vmatpush2.msra.mxu0 0.0
      %325 = vmatprep.subr.mxu0 0.0
      %326 = vmatpush2.msra.mxu0 0.0
      %327 = vmatprep.subr.mxu0 0.0
      %328 = vmatpush2.msra.mxu0 0.0
      %329 = vmatprep.subr.mxu0 0.0
      %330 = vmatpush2.msra.mxu0 0.0
      %331 = vmatprep.subr.mxu0 0.0
      %332 = vmatpush2.msra.mxu0 0.0
      %333 = vmatprep.subr.mxu0 0.0
      %334 = vmatpush2.msra.mxu0 0.0
      %335 = vmatprep.subr.mxu0 0.0
      %336 = vmatpush2.msra.mxu0 0.0
      %337 = vmatprep.subr.mxu0 0.0
      %338 = vmatpush2.msra.mxu0 0.0
      %339 = vmatprep.subr.mxu0 0.0
      %340 = vmatpush2.msra.mxu0 0.0
      %341 = vmatprep.subr.mxu0 0.0
      %342 = vmatpush2.msra.mxu0 0.0
      %343 = vmatprep.subr.mxu0 0.0
      %344 = vmatpush2.msra.mxu0 0.0
      %345 = vmatprep.subr.mxu0 0.0
      %346 = vmatpush2.msra.mxu0 0.0
      %347 = vmatprep.subr.mxu0 0.0
      %348 = vmatpush2.msra.mxu0 0.0
      %349 = vmatprep.subr.mxu0 0.0
      %350 = vmatpush2.msra.mxu0 0.0
      %351 = vmatprep.subr.mxu0 0.0
      %352 = vmatpush2.msra.mxu0 0.0
      %353 = vmatprep.mubr.f32.mxu0 0.0
      %v354 = vand.u32 %v282, 4294901760
      %v355 = vsub.f32 %v282, %v354
      %v356 = vand.u32 %v355, 4294901760
      %v357 = vsub.f32 %v355, %v356
      %v358 = vand.u32 %v357, 4294901760
      %359 = vmatmul.mubr.f32.gmra.mxu0 %v358
      %v360 = vpop.f32.mrf.mxu0
      %v361 = vadd.f32 0.0, %v360
      %v362 = vpop.f32.mrf.mxu0
      %363 = vdwg.mxu0
      %364 = vmatprep.subr.mxu0 0.0
      %365 = vmatpush1.msra.mxu0 0.0
      %366 = vmatprep.subr.mxu0 0.0
      %367 = vmatpush1.msra.mxu0 0.0
      %368 = vmatprep.subr.mxu0 0.0
      %369 = vmatpush1.msra.mxu0 0.0
      %370 = vmatprep.subr.mxu0 0.0
      %371 = vmatpush1.msra.mxu0 0.0
      %372 = vmatprep.subr.mxu0 0.0
      %373 = vmatpush1.msra.mxu0 0.0
      %374 = vmatprep.subr.mxu0 0.0
      %375 = vmatpush1.msra.mxu0 0.0
      %376 = vmatprep.subr.mxu0 0.0
      %377 = vmatpush1.msra.mxu0 0.0
      %378 = vmatprep.subr.mxu0 0.0
      %379 = vmatpush1.msra.mxu0 0.0
      %380 = vmatprep.subr.mxu0 0.0
      %381 = vmatpush1.msra.mxu0 0.0
      %382 = vmatprep.subr.mxu0 0.0
      %383 = vmatpush1.msra.mxu0 0.0
      %384 = vmatprep.subr.mxu0 0.0
      %385 = vmatpush1.msra.mxu0 0.0
      %386 = vmatprep.subr.mxu0 0.0
      %387 = vmatpush1.msra.mxu0 0.0
      %388 = vmatprep.subr.mxu0 0.0
      %389 = vmatpush1.msra.mxu0 0.0
      %390 = vmatprep.subr.mxu0 0.0
      %391 = vmatpush1.msra.mxu0 0.0
      %392 = vmatprep.subr.mxu0 0.0
      %393 = vmatpush1.msra.mxu0 0.0
      %394 = vmatprep.subr.mxu0 0.0
      %v395 = vand.u32 %v286, 4294901760
      %v396 = vsub.f32 %v286, %v395
      %v397 = vand.u32 %v396, 4294901760
      %v398 = vsub.f32 %v396, %v397
      %v399 = vand.u32 %v398, 4294901760
      %400 = vmatpush1.msra.mxu0 %v399
      %401 = vmatprep.subr.mxu0 0.0
      %402 = vmatpush2.msra.mxu0 0.0
      %403 = vmatprep.subr.mxu0 0.0
      %404 = vmatpush2.msra.mxu0 0.0
      %405 = vmatprep.subr.mxu0 0.0
      %406 = vmatpush2.msra.mxu0 0.0
      %407 = vmatprep.subr.mxu0 0.0
      %408 = vmatpush2.msra.mxu0 0.0
      %409 = vmatprep.subr.mxu0 0.0
      %410 = vmatpush2.msra.mxu0 0.0
      %411 = vmatprep.subr.mxu0 0.0
      %412 = vmatpush2.msra.mxu0 0.0
      %413 = vmatprep.subr.mxu0 0.0
      %414 = vmatpush2.msra.mxu0 0.0
      %415 = vmatprep.subr.mxu0 0.0
      %416 = vmatpush2.msra.mxu0 0.0
      %417 = vmatprep.subr.mxu0 0.0
      %418 = vmatpush2.msra.mxu0 0.0
      %419 = vmatprep.subr.mxu0 0.0
      %420 = vmatpush2.msra.mxu0 0.0
      %421 = vmatprep.subr.mxu0 0.0
      %422 = vmatpush2.msra.mxu0 0.0
      %423 = vmatprep.subr.mxu0 0.0
      %424 = vmatpush2.msra.mxu0 0.0
      %425 = vmatprep.subr.mxu0 0.0
      %426 = vmatpush2.msra.mxu0 0.0
      %427 = vmatprep.subr.mxu0 0.0
      %428 = vmatpush2.msra.mxu0 0.0
      %429 = vmatprep.subr.mxu0 0.0
      %430 = vmatpush2.msra.mxu0 0.0
      %431 = vmatprep.subr.mxu0 0.0
      %432 = vmatpush2.msra.mxu0 0.0
      %433 = vmatprep.mubr.f32.mxu0 0.0
      %v434 = vand.u32 %v282, 4294901760
      %435 = vmatmul.mubr.f32.gmra.mxu0 %v434
      %v436 = vpop.f32.mrf.mxu0
      %v437 = vadd.f32 %v361, %v436
      %v438 = vpop.f32.mrf.mxu0
      %439 = vdwg.mxu0
      %440 = vmatprep.subr.mxu0 0.0
      %441 = vmatpush1.msra.mxu0 0.0
      %442 = vmatprep.subr.mxu0 0.0
      %443 = vmatpush1.msra.mxu0 0.0
      %444 = vmatprep.subr.mxu0 0.0
      %445 = vmatpush1.msra.mxu0 0.0
      %446 = vmatprep.subr.mxu0 0.0
      %447 = vmatpush1.msra.mxu0 0.0
      %448 = vmatprep.subr.mxu0 0.0
      %449 = vmatpush1.msra.mxu0 0.0
      %450 = vmatprep.subr.mxu0 0.0
      %451 = vmatpush1.msra.mxu0 0.0
      %452 = vmatprep.subr.mxu0 0.0
      %453 = vmatpush1.msra.mxu0 0.0
      %454 = vmatprep.subr.mxu0 0.0
      %455 = vmatpush1.msra.mxu0 0.0
      %456 = vmatprep.subr.mxu0 0.0
      %457 = vmatpush1.msra.mxu0 0.0
      %458 = vmatprep.subr.mxu0 0.0
      %459 = vmatpush1.msra.mxu0 0.0
      %460 = vmatprep.subr.mxu0 0.0
      %461 = vmatpush1.msra.mxu0 0.0
      %462 = vmatprep.subr.mxu0 0.0
      %463 = vmatpush1.msra.mxu0 0.0
      %464 = vmatprep.subr.mxu0 0.0
      %465 = vmatpush1.msra.mxu0 0.0
      %466 = vmatprep.subr.mxu0 0.0
      %467 = vmatpush1.msra.mxu0 0.0
      %468 = vmatprep.subr.mxu0 0.0
      %469 = vmatpush1.msra.mxu0 0.0
      %470 = vmatprep.subr.mxu0 0.0
      %v471 = vand.u32 %v286, 4294901760
      %v472 = vsub.f32 %v286, %v471
      %473 = vmatpush1.msra.mxu0 %v472
      %474 = vmatprep.subr.mxu0 0.0
      %475 = vmatpush2.msra.mxu0 0.0
      %476 = vmatprep.subr.mxu0 0.0
      %477 = vmatpush2.msra.mxu0 0.0
      %478 = vmatprep.subr.mxu0 0.0
      %479 = vmatpush2.msra.mxu0 0.0
      %480 = vmatprep.subr.mxu0 0.0
      %481 = vmatpush2.msra.mxu0 0.0
      %482 = vmatprep.subr.mxu0 0.0
      %483 = vmatpush2.msra.mxu0 0.0
      %484 = vmatprep.subr.mxu0 0.0
      %485 = vmatpush2.msra.mxu0 0.0
      %486 = vmatprep.subr.mxu0 0.0
      %487 = vmatpush2.msra.mxu0 0.0
      %488 = vmatprep.subr.mxu0 0.0
      %489 = vmatpush2.msra.mxu0 0.0
      %490 = vmatprep.subr.mxu0 0.0
      %491 = vmatpush2.msra.mxu0 0.0
      %492 = vmatprep.subr.mxu0 0.0
      %493 = vmatpush2.msra.mxu0 0.0
      %494 = vmatprep.subr.mxu0 0.0
      %495 = vmatpush2.msra.mxu0 0.0
      %496 = vmatprep.subr.mxu0 0.0
      %497 = vmatpush2.msra.mxu0 0.0
      %498 = vmatprep.subr.mxu0 0.0
      %499 = vmatpush2.msra.mxu0 0.0
      %500 = vmatprep.subr.mxu0 0.0
      %501 = vmatpush2.msra.mxu0 0.0
      %502 = vmatprep.subr.mxu0 0.0
      %503 = vmatpush2.msra.mxu0 0.0
      %504 = vmatprep.subr.mxu0 0.0
      %505 = vmatpush2.msra.mxu0 0.0
      %506 = vmatprep.mubr.f32.mxu0 0.0
      %v507 = vand.u32 %v282, 4294901760
      %v508 = vsub.f32 %v282, %v507
      %509 = vmatmul.mubr.f32.gmra.mxu0 %v508
      %v510 = vpop.f32.mrf.mxu0
      %v511 = vadd.f32 %v437, %v510
      %v512 = vpop.f32.mrf.mxu0
      %513 = vdwg.mxu0
      %514 = vmatprep.subr.mxu0 0.0
      %515 = vmatpush1.msra.mxu0 0.0
      %516 = vmatprep.subr.mxu0 0.0
      %517 = vmatpush1.msra.mxu0 0.0
      %518 = vmatprep.subr.mxu0 0.0
      %519 = vmatpush1.msra.mxu0 0.0
      %520 = vmatprep.subr.mxu0 0.0
      %521 = vmatpush1.msra.mxu0 0.0
      %522 = vmatprep.subr.mxu0 0.0
      %523 = vmatpush1.msra.mxu0 0.0
      %524 = vmatprep.subr.mxu0 0.0
      %525 = vmatpush1.msra.mxu0 0.0
      %526 = vmatprep.subr.mxu0 0.0
      %527 = vmatpush1.msra.mxu0 0.0
      %528 = vmatprep.subr.mxu0 0.0
      %529 = vmatpush1.msra.mxu0 0.0
      %530 = vmatprep.subr.mxu0 0.0
      %531 = vmatpush1.msra.mxu0 0.0
      %532 = vmatprep.subr.mxu0 0.0
      %533 = vmatpush1.msra.mxu0 0.0
      %534 = vmatprep.subr.mxu0 0.0
      %535 = vmatpush1.msra.mxu0 0.0
      %536 = vmatprep.subr.mxu0 0.0
      %537 = vmatpush1.msra.mxu0 0.0
      %538 = vmatprep.subr.mxu0 0.0
      %539 = vmatpush1.msra.mxu0 0.0
      %540 = vmatprep.subr.mxu0 0.0
      %541 = vmatpush1.msra.mxu0 0.0
      %542 = vmatprep.subr.mxu0 0.0
      %543 = vmatpush1.msra.mxu0 0.0
      %544 = vmatprep.subr.mxu0 0.0
      %v545 = vand.u32 %v286, 4294901760
      %546 = vmatpush1.msra.mxu0 %v545
      %547 = vmatprep.subr.mxu0 0.0
      %548 = vmatpush2.msra.mxu0 0.0
      %549 = vmatprep.subr.mxu0 0.0
      %550 = vmatpush2.msra.mxu0 0.0
      %551 = vmatprep.subr.mxu0 0.0
      %552 = vmatpush2.msra.mxu0 0.0
      %553 = vmatprep.subr.mxu0 0.0
      %554 = vmatpush2.msra.mxu0 0.0
      %555 = vmatprep.subr.mxu0 0.0
      %556 = vmatpush2.msra.mxu0 0.0
      %557 = vmatprep.subr.mxu0 0.0
      %558 = vmatpush2.msra.mxu0 0.0
      %559 = vmatprep.subr.mxu0 0.0
      %560 = vmatpush2.msra.mxu0 0.0
      %561 = vmatprep.subr.mxu0 0.0
      %562 = vmatpush2.msra.mxu0 0.0
      %563 = vmatprep.subr.mxu0 0.0
      %564 = vmatpush2.msra.mxu0 0.0
      %565 = vmatprep.subr.mxu0 0.0
      %566 = vmatpush2.msra.mxu0 0.0
      %567 = vmatprep.subr.mxu0 0.0
      %568 = vmatpush2.msra.mxu0 0.0
      %569 = vmatprep.subr.mxu0 0.0
      %570 = vmatpush2.msra.mxu0 0.0
      %571 = vmatprep.subr.mxu0 0.0
      %572 = vmatpush2.msra.mxu0 0.0
      %573 = vmatprep.subr.mxu0 0.0
      %574 = vmatpush2.msra.mxu0 0.0
      %575 = vmatprep.subr.mxu0 0.0
      %576 = vmatpush2.msra.mxu0 0.0
      %577 = vmatprep.subr.mxu0 0.0
      %578 = vmatpush2.msra.mxu0 0.0
      %579 = vmatprep.mubr.f32.mxu0 0.0
      %v580 = vand.u32 %v282, 4294901760
      %v581 = vsub.f32 %v282, %v580
      %v582 = vand.u32 %v581, 4294901760
      %583 = vmatmul.mubr.f32.gmra.mxu0 %v582
      %v584 = vpop.f32.mrf.mxu0
      %v585 = vadd.f32 %v511, %v584
      %v586 = vpop.f32.mrf.mxu0
      %587 = vdwg.mxu0
      %588 = vmatprep.subr.mxu0 0.0
      %589 = vmatpush1.msra.mxu0 0.0
      %590 = vmatprep.subr.mxu0 0.0
      %591 = vmatpush1.msra.mxu0 0.0
      %592 = vmatprep.subr.mxu0 0.0
      %593 = vmatpush1.msra.mxu0 0.0
      %594 = vmatprep.subr.mxu0 0.0
      %595 = vmatpush1.msra.mxu0 0.0
      %596 = vmatprep.subr.mxu0 0.0
      %597 = vmatpush1.msra.mxu0 0.0
      %598 = vmatprep.subr.mxu0 0.0
      %599 = vmatpush1.msra.mxu0 0.0
      %600 = vmatprep.subr.mxu0 0.0
      %601 = vmatpush1.msra.mxu0 0.0
      %602 = vmatprep.subr.mxu0 0.0
      %603 = vmatpush1.msra.mxu0 0.0
      %604 = vmatprep.subr.mxu0 0.0
      %605 = vmatpush1.msra.mxu0 0.0
      %606 = vmatprep.subr.mxu0 0.0
      %607 = vmatpush1.msra.mxu0 0.0
      %608 = vmatprep.subr.mxu0 0.0
      %609 = vmatpush1.msra.mxu0 0.0
      %610 = vmatprep.subr.mxu0 0.0
      %611 = vmatpush1.msra.mxu0 0.0
      %612 = vmatprep.subr.mxu0 0.0
      %613 = vmatpush1.msra.mxu0 0.0
      %614 = vmatprep.subr.mxu0 0.0
      %615 = vmatpush1.msra.mxu0 0.0
      %616 = vmatprep.subr.mxu0 0.0
      %617 = vmatpush1.msra.mxu0 0.0
      %618 = vmatprep.subr.mxu0 0.0
      %v619 = vand.u32 %v286, 4294901760
      %v620 = vsub.f32 %v286, %v619
      %v621 = vand.u32 %v620, 4294901760
      %622 = vmatpush1.msra.mxu0 %v621
      %623 = vmatprep.subr.mxu0 0.0
      %624 = vmatpush2.msra.mxu0 0.0
      %625 = vmatprep.subr.mxu0 0.0
      %626 = vmatpush2.msra.mxu0 0.0
      %627 = vmatprep.subr.mxu0 0.0
      %628 = vmatpush2.msra.mxu0 0.0
      %629 = vmatprep.subr.mxu0 0.0
      %630 = vmatpush2.msra.mxu0 0.0
      %631 = vmatprep.subr.mxu0 0.0
      %632 = vmatpush2.msra.mxu0 0.0
      %633 = vmatprep.subr.mxu0 0.0
      %634 = vmatpush2.msra.mxu0 0.0
      %635 = vmatprep.subr.mxu0 0.0
      %636 = vmatpush2.msra.mxu0 0.0
      %637 = vmatprep.subr.mxu0 0.0
      %638 = vmatpush2.msra.mxu0 0.0
      %639 = vmatprep.subr.mxu0 0.0
      %640 = vmatpush2.msra.mxu0 0.0
      %641 = vmatprep.subr.mxu0 0.0
      %642 = vmatpush2.msra.mxu0 0.0
      %643 = vmatprep.subr.mxu0 0.0
      %644 = vmatpush2.msra.mxu0 0.0
      %645 = vmatprep.subr.mxu0 0.0
      %646 = vmatpush2.msra.mxu0 0.0
      %647 = vmatprep.subr.mxu0 0.0
      %648 = vmatpush2.msra.mxu0 0.0
      %649 = vmatprep.subr.mxu0 0.0
      %650 = vmatpush2.msra.mxu0 0.0
      %651 = vmatprep.subr.mxu0 0.0
      %652 = vmatpush2.msra.mxu0 0.0
      %653 = vmatprep.subr.mxu0 0.0
      %654 = vmatpush2.msra.mxu0 0.0
      %655 = vmatprep.mubr.f32.mxu0 0.0
      %v656 = vand.u32 %v282, 4294901760
      %657 = vmatmul.mubr.f32.gmra.mxu0 %v656
      %v658 = vpop.f32.mrf.mxu0
      %v659 = vadd.f32 %v585, %v658
      %v660 = vpop.f32.mrf.mxu0
      %661 = vdwg.mxu0
      %662 = vmatprep.subr.mxu0 0.0
      %663 = vmatpush1.msra.mxu0 0.0
      %664 = vmatprep.subr.mxu0 0.0
      %665 = vmatpush1.msra.mxu0 0.0
      %666 = vmatprep.subr.mxu0 0.0
      %667 = vmatpush1.msra.mxu0 0.0
      %668 = vmatprep.subr.mxu0 0.0
      %669 = vmatpush1.msra.mxu0 0.0
      %670 = vmatprep.subr.mxu0 0.0
      %671 = vmatpush1.msra.mxu0 0.0
      %672 = vmatprep.subr.mxu0 0.0
      %673 = vmatpush1.msra.mxu0 0.0
      %674 = vmatprep.subr.mxu0 0.0
      %675 = vmatpush1.msra.mxu0 0.0
      %676 = vmatprep.subr.mxu0 0.0
      %677 = vmatpush1.msra.mxu0 0.0
      %678 = vmatprep.subr.mxu0 0.0
      %679 = vmatpush1.msra.mxu0 0.0
      %680 = vmatprep.subr.mxu0 0.0
      %681 = vmatpush1.msra.mxu0 0.0
      %682 = vmatprep.subr.mxu0 0.0
      %683 = vmatpush1.msra.mxu0 0.0
      %684 = vmatprep.subr.mxu0 0.0
      %685 = vmatpush1.msra.mxu0 0.0
      %686 = vmatprep.subr.mxu0 0.0
      %687 = vmatpush1.msra.mxu0 0.0
      %688 = vmatprep.subr.mxu0 0.0
      %689 = vmatpush1.msra.mxu0 0.0
      %690 = vmatprep.subr.mxu0 0.0
      %691 = vmatpush1.msra.mxu0 0.0
      %692 = vmatprep.subr.mxu0 0.0
      %v693 = vand.u32 %v286, 4294901760
      %694 = vmatpush1.msra.mxu0 %v693
      %695 = vmatprep.subr.mxu0 0.0
      %696 = vmatpush2.msra.mxu0 0.0
      %697 = vmatprep.subr.mxu0 0.0
      %698 = vmatpush2.msra.mxu0 0.0
      %699 = vmatprep.subr.mxu0 0.0
      %700 = vmatpush2.msra.mxu0 0.0
      %701 = vmatprep.subr.mxu0 0.0
      %702 = vmatpush2.msra.mxu0 0.0
      %703 = vmatprep.subr.mxu0 0.0
      %704 = vmatpush2.msra.mxu0 0.0
      %705 = vmatprep.subr.mxu0 0.0
      %706 = vmatpush2.msra.mxu0 0.0
      %707 = vmatprep.subr.mxu0 0.0
      %708 = vmatpush2.msra.mxu0 0.0
      %709 = vmatprep.subr.mxu0 0.0
      %710 = vmatpush2.msra.mxu0 0.0
      %711 = vmatprep.subr.mxu0 0.0
      %712 = vmatpush2.msra.mxu0 0.0
      %713 = vmatprep.subr.mxu0 0.0
      %714 = vmatpush2.msra.mxu0 0.0
      %715 = vmatprep.subr.mxu0 0.0
      %716 = vmatpush2.msra.mxu0 0.0
      %717 = vmatprep.subr.mxu0 0.0
      %718 = vmatpush2.msra.mxu0 0.0
      %719 = vmatprep.subr.mxu0 0.0
      %720 = vmatpush2.msra.mxu0 0.0
      %721 = vmatprep.subr.mxu0 0.0
      %722 = vmatpush2.msra.mxu0 0.0
      %723 = vmatprep.subr.mxu0 0.0
      %724 = vmatpush2.msra.mxu0 0.0
      %725 = vmatprep.subr.mxu0 0.0
      %726 = vmatpush2.msra.mxu0 0.0
      %727 = vmatprep.mubr.f32.mxu0 0.0
      %v728 = vand.u32 %v282, 4294901760
      %729 = vmatmul.mubr.f32.gmra.mxu0 %v728
      %v730 = vpop.f32.mrf.mxu0
      %v731 = vadd.f32 %v659, %v730
      %v732 = vpop.f32.mrf.mxu0
      %733 = vdwg.mxu0
      %734 = vst [vmem:[%s269] sm:$0x1] %v731
      %v735 = vsel %vm284, %v278, -inf
      %v736 = vrot.slane %v735, 4
      %v737 = vmax.f32 %v735, %v736
      %v738 = vrot.slane %v737, 2
      %v739 = vmax.f32 %v737, %v738
      %v740 = vrot.slane %v739, 1
      %v741 = vmax.f32 %v739, %v740
      %742 = vst [vmem:[%s269 + $0x1] sm:$0x1] %v741
      %s743 = sld [smem:[#allocation2]]
      %v744 = vstv %s743
      %v745 = vadd.f32 %v731, %v744
      %746 = vst [vmem:[%s269 + $0x1] sm:$0x2] %v745
      %v747 = vld [vmem:[%s3] sm:$0xf]
      %749 = vset.pattern.permute.xlu0 0
      %750 = vperm.xlu0 %749, %v747
      %v751 = vpop.permute.xlu0 %750
      %v753 = vsub.f32 %v278, %v751
      %v754 = vsel %vm284, %v753, 0.0
      %755 = vadd.xlane.f32.xlu0 %v754
      %v756 = vpop.xlane.xlu0 %755
      %vm757 = vcmask 3072
      %758 = vst.msk [vmem:[%s277] sm:$0xf] %vm757, %v756
      %v759 = vmul.f32 %v753, %v753
      %v760 = vsel %vm284, %v759, 0.0
      %761 = vadd.xlane.f32.xlu0 %v760
      %v762 = vpop.xlane.xlu0 %761
      %vm763 = vcmask 11272
      %764 = vst.msk [vmem:[%s277] sm:$0xf] %vm763, %v762
      %p765 = scmp.lt.s32.totalorder %s22, 1
      %s766 = scalar_select %p765, %s22, 1
      %p767 = scmp.lt.s32.totalorder %s23, 3
      %s768 = scalar_select %p767, %s23, 3
      %s769 = smul.addr %s766, 4
      %s770 = sadd.s32 %s768, %s769
      %s771 = smul.addr %s770, 4
      %s772 = scalar_lea.vmem %s4, %s771
      %p773 = scmp.lt.s32.totalorder %s22, 1
      %s774 = scalar_select %p773, %s22, 1
      %p775 = scmp.lt.s32.totalorder %s23, 3
      %s776 = scalar_select %p775, %s23, 3
      %s777 = smul.addr %s774, 4
      %s778 = sadd.s32 %s776, %s777
      %s779 = smul.addr %s778, 4
      %s780 = scalar_lea.vmem %s5, %s779
      // Predicated region
      $region37: #{spatial_se_3d.2} parent=35 // pred_check
        %p781 = pneg %p141
      $region38: #{spatial_se_3d.2} parent=35 // pred_check_branch
        %783 = sbr.rel (%p781) target = $region40
      $region39: #{spatial_se_3d.2} parent=35 // pred_region
        _
      $region40: #{spatial_se_3d.2} parent=35 // pred_fallthru
        _
      // Predicated region
      $region41: #{spatial_se_3d.2} parent=35 // pred_check
        %p784 = pneg %p169
      $region42: #{spatial_se_3d.2} parent=35 // pred_check_branch
        %786 = sbr.rel (%p784) target = $region44
      $region43: #{spatial_se_3d.2} parent=35 // pred_region
        _
      $region44: #{spatial_se_3d.2} parent=35 // pred_fallthru
        _
    $region36: #{spatial_se_3d.2} parent=5 // pred_fallthru
      _
    %p787 = scmp.le.s32.totalorder 2, %s13
    // Predicated region
    $region45: #{spatial_se_3d.2} parent=5 // pred_check
      %p788 = pneg %p787
    $region46: #{spatial_se_3d.2} parent=5 // pred_check_branch
      %790 = sbr.rel (%p788) target = $region48
    $region47: #{spatial_se_3d.2} parent=5 // pred_region
      %s791 = ssub.s32 %s13, 2
      // Predicated region
      $region49: #{spatial_se_3d.2} parent=47 // pred_check
        %p792 = pneg %p147
      $region50: #{spatial_se_3d.2} parent=47 // pred_check_branch
        %794 = sbr.rel (%p792) target = $region52
      $region51: #{spatial_se_3d.2} parent=47 // pred_region
        %p795 = scmp.lt.s32.totalorder %s24, 1
        %s796 = scalar_select %p795, %s24, 1
        %p797 = scmp.lt.s32.totalorder %s25, 3
        %s798 = scalar_select %p797, %s25, 3
        %s799 = smul.addr %s796, 4
        %s800 = sadd.s32 %s798, %s799
        %s801 = smul.addr %s800, 4
        %s802 = scalar_lea.vmem %s4, %s801
      $region52: #{spatial_se_3d.2} parent=47 // pred_fallthru
        _
      // Predicated region
      $region53: #{spatial_se_3d.2} parent=47 // pred_check
        %p803 = pneg %p175
      $region54: #{spatial_se_3d.2} parent=47 // pred_check_branch
        %805 = sbr.rel (%p803) target = $region56
      $region55: #{spatial_se_3d.2} parent=47 // pred_region
        %p806 = scmp.lt.s32.totalorder %s24, 1
        %s807 = scalar_select %p806, %s24, 1
        %p808 = scmp.lt.s32.totalorder %s25, 3
        %s809 = scalar_select %p808, %s25, 3
        %s810 = smul.addr %s807, 4
        %s811 = sadd.s32 %s809, %s810
        %s812 = smul.addr %s811, 4
        %s813 = scalar_lea.vmem %s5, %s812
      $region56: #{spatial_se_3d.2} parent=47 // pred_fallthru
        _
    $region48: #{spatial_se_3d.2} parent=5 // pred_fallthru
      _
  $region6: #{spatial_se_3d.2} parent=0 // loop_footer
    %s17 = sadd.s32 1, %s13
  $region7: #{spatial_se_3d.2} parent=0 // loop_footer_branch
    %12 = sbr.rel target = $region3
  $region8: #{spatial_se_3d.2} parent=0 // loop_exit
    _

</llo_original>
